<compile_context>
chip_gen: v7x
topology: tpu7x:2x2x1
jax: 0.10.0
libtpu: 0.0.40
codegen_flags: <defaults>
</compile_context>

<pallas_src>
import jax
import jax.numpy as jnp
from jax.experimental import pallas as pl
from jax.experimental.pallas import tpu as pltpu


def _round_up(x, m):
    return (x + m - 1) // m * m


def _cdiv(a, b):
    return (a + b - 1) // b


def _patch_embed_kernel(x_ref, w_ref, b_ref, o_ref):
    # x_ref: (tm, P_pad)     patch rows (bf16 or f32)
    # w_ref: (P_pad, E_pad)  full projection weight (VMEM-resident, constant idx)
    # b_ref: (1, E_pad)      f32 bias
    # o_ref: (tm, E_pad)     output tile (lane-dense, unmasked vst)
    acc = jnp.dot(x_ref[...], w_ref[...],
                  preferred_element_type=jnp.float32)      # MXU, f32 accumulate
    o_ref[...] = (acc + b_ref[...]).astype(o_ref.dtype)


def patch_embed_pallas(x_nchw, weight, bias, patch_size, *,
                       compute_dtype=jnp.bfloat16, out_dtype=None, tm=512):
    """ViT patch embedding (Conv2d with kernel_size == stride).

    x_nchw: (B, C, H, W); weight: (E, C, ph, pw); bias: (E,).
    Returns (B, num_patches, E) in `out_dtype` (default: x_nchw.dtype; pass
    jnp.bfloat16 to halve output HBM writeback if the caller runs in bf16).
    """
    B, C, H, W = x_nchw.shape
    E = weight.shape[0]
    gh, gw = H // patch_size, W // patch_size
    N = gh * gw
    P = C * patch_size * patch_size
    M = B * N
    if out_dtype is None:
        out_dtype = x_nchw.dtype

    # Lane-dense padding: P and E to multiples of 128.  E is padded exactly to
    # 128-multiples (single E-tile) -> no over-padding waste.
    P_pad = _round_up(P, 128)
    E_pad = _round_up(E, 128)

    # M tiling: multiple of 16 (bf16 sublane packing).  Prefer >= 2 tiles so a
    # dual-TensorCore chip (v7x) can shard the single parallel grid axis.
    tm_eff = min(tm, _round_up(M, 16))
    if _cdiv(M, tm_eff) == 1 and M > 16:
        tm_eff = _round_up(_cdiv(M, 2), 16)
    M_pad = _round_up(M, tm_eff)
    grid = (M_pad // tm_eff,)

    # --- patch extraction: (B,C,H,W) -> (M, P), flattened in (C, ph, pw) order
    # to match the Conv2d weight flattening.  Single chained expression so XLA
    # fuses transpose + cast + pad into one read-f32/write-bf16 HBM pass.
    # TODO(synk): fuse this rearrange into the kernel's input DMA / in-VMEM
    # once Mosaic supports the required lane-split relayout in-kernel.
    x_p = jnp.pad(
        x_nchw.reshape(B, C, gh, patch_size, gw, patch_size)
              .transpose(0, 2, 4, 1, 3, 5)
              .reshape(M, P)
              .astype(compute_dtype),
        ((0, M_pad - M), (0, P_pad - P)))

    # Weight -> (P, E) padded; fetched into VMEM once (constant block index).
    w_p = jnp.pad(weight.reshape(E, P).T.astype(compute_dtype),
                  ((0, P_pad - P), (0, E_pad - E)))
    b_p = jnp.pad(bias.astype(jnp.float32)[None, :], ((0, 0), (0, E_pad - E)))

    in_size = jnp.dtype(compute_dtype).itemsize
    out_size = jnp.dtype(out_dtype).itemsize
    cost = pl.CostEstimate(
        flops=2 * M_pad * P_pad * E_pad,
        transcendentals=0,
        bytes_accessed=(M_pad * P_pad * in_size       # patches, streamed once
                        + P_pad * E_pad * in_size     # weight, fetched once
                        + E_pad * 4                   # bias
                        + M_pad * E_pad * out_size),  # output writeback
    )

    out = pl.pallas_call(
        _patch_embed_kernel,
        out_shape=jax.ShapeDtypeStruct((M_pad, E_pad), out_dtype),
        grid_spec=pltpu.PrefetchScalarGridSpec(
            num_scalar_prefetch=0,
            grid=grid,
            in_specs=[
                pl.BlockSpec((tm_eff, P_pad), lambda i: (i, 0)),
                # Constant block indices -> weight / bias are DMA'd from HBM
                # exactly once and stay VMEM-resident across all M-tiles.
                pl.BlockSpec((P_pad, E_pad), lambda i: (0, 0)),
                pl.BlockSpec((1, E_pad), lambda i: (0, 0)),
            ],
            out_specs=pl.BlockSpec((tm_eff, E_pad), lambda i: (i, 0)),
        ),
        compiler_params=pltpu.CompilerParams(
            # Independent M-axis -> megacore / dual-TC sharding on v7x.
            dimension_semantics=("parallel",),
            # Explicit scoped budget (v5e default is only 16 MiB).  Resident
            # set at tm=512 / E_pad~1280 is ~12 MiB double-buffered, so 32 MiB
            # is safe on v5e/v6e and well inside v7x's 64 MiB physical VMEM.
            vmem_limit_bytes=32 * 1024 * 1024,
        ),
        cost_estimate=cost,
    )(x_p, w_p, b_p)

    return out[:M, :E].reshape(B, N, E)


if __name__ == "__main__":
    # Small shapes consistent with the module: img_size=16, patch_size=4,
    # in_chans=4, embed_dim=32  ->  grid_size=4, num_patches=16.
    B, C, IMG, PATCH, EMBED = 2, 4, 16, 4, 32

    key = jax.random.PRNGKey(0)
    kx, kw, kb = jax.random.split(key, 3)

    x = jax.random.normal(kx, (B, C, IMG, IMG), dtype=jnp.float32)

    # Deterministic parameter init (Conv2d-like uniform fan-in scaling).
    fan_in = C * PATCH * PATCH
    bound = 1.0 / (fan_in ** 0.5)
    weight = jax.random.uniform(kw, (EMBED, C, PATCH, PATCH),
                                minval=-bound, maxval=bound, dtype=jnp.float32)
    bias = jax.random.uniform(kb, (EMBED,), minval=-bound, maxval=bound,
                              dtype=jnp.float32)

    out = patch_embed_pallas(x, weight, bias, PATCH)
    out = jax.block_until_ready(out)

    # Pure-JAX reference (strided conv == per-patch matmul).
    gh = IMG // PATCH
    patches = x.reshape(B, C, gh, PATCH, gh, PATCH).transpose(0, 2, 4, 1, 3, 5)
    patches = patches.reshape(B, gh * gh, fan_in)
    ref_f32 = patches @ weight.reshape(EMBED, fan_in).T + bias[None, None, :]

    assert out.shape == (B, gh * gh, EMBED), out.shape
    # bf16 MXU operands with f32 accumulation -> bf16-level tolerance.
    assert jnp.allclose(out, ref_f32, atol=5e-2, rtol=5e-2), float(
        jnp.max(jnp.abs(out - ref_f32)))

    # Exact-path check with f32 operands.
    out_f32 = patch_embed_pallas(x, weight, bias, PATCH,
                                 compute_dtype=jnp.float32)
    out_f32 = jax.block_until_ready(out_f32)
    assert jnp.allclose(out_f32, ref_f32, atol=1e-4, rtol=1e-4)

    print("KERNEL_OK")
</pallas_src>

<mosaic_0001>
module attributes {stable_mosaic.version = 11 : i64} {
  func.func @_patch_embed_kernel(%arg0: i32, %arg1: memref<16x128xbf16, #tpu.memory_space<vmem>>, %arg2: memref<128x128xbf16, #tpu.memory_space<vmem>>, %arg3: memref<1x128xf32, #tpu.memory_space<vmem>>, %arg4: memref<16x128xf32, #tpu.memory_space<vmem>>) attributes {dimension_semantics = [#tpu.dimension_semantics<parallel>], iteration_bounds = array<i64: 2>, scalar_prefetch = 0 : i64, scratch_operands = 0 : i64, tpu.core_type = #tpu.core_type<tc>, window_params = [{transform_indices = @transform_0, window_bounds = array<i64: 16, 128>}, {pipeline_mode = #tpu.pipeline_mode<synchronous>, transform_indices = @transform_1, window_bounds = array<i64: 128, 128>}, {pipeline_mode = #tpu.pipeline_mode<synchronous>, transform_indices = @transform_2, window_bounds = array<i64: 1, 128>}, {transform_indices = @transform_3, window_bounds = array<i64: 16, 128>}]} {
    %c0 = arith.constant 0 : index
    %c0_0 = arith.constant 0 : index
    %0 = vector.load %arg1[%c0, %c0_0] : memref<16x128xbf16, #tpu.memory_space<vmem>>, vector<16x128xbf16>
    %c0_1 = arith.constant 0 : index
    %c0_2 = arith.constant 0 : index
    %1 = vector.load %arg2[%c0_1, %c0_2] : memref<128x128xbf16, #tpu.memory_space<vmem>>, vector<128x128xbf16>
    %cst = arith.constant dense<0.000000e+00> : vector<16x128xf32>
    %2 = tpu.matmul %0, %1, %cst {dimension_numbers = #tpu.dot_dimension_numbers<[1], [0], [0], [1], [0, 0, 1, 1], [], []>} : vector<16x128xbf16>, vector<128x128xbf16>, vector<16x128xf32> -> vector<16x128xf32>
    %c0_3 = arith.constant 0 : index
    %c0_4 = arith.constant 0 : index
    %3 = vector.load %arg3[%c0_3, %c0_4] : memref<1x128xf32, #tpu.memory_space<vmem>>, vector<1x128xf32>
    %4 = vector.broadcast %3 : vector<1x128xf32> to vector<16x128xf32>
    %5 = arith.addf %2, %4 : vector<16x128xf32>
    %c0_5 = arith.constant 0 : index
    %c0_6 = arith.constant 0 : index
    %6 = vector.load %arg4[%c0_5, %c0_6] : memref<16x128xf32, #tpu.memory_space<vmem>>, vector<16x128xf32>
    tpu.vector_store %arg4[%c0_5, %c0_6], %5 {strides = array<i32>} : memref<16x128xf32, #tpu.memory_space<vmem>>, vector<16x128xf32>,
    return
  }
  func.func @transform_0(%arg0: i32) -> (i32, i32) {
    %c0_i32 = arith.constant 0 : i32
    %c0_i32_0 = arith.constant 0 : i32
    return %arg0, %c0_i32 : i32, i32
  }
  func.func @transform_1(%arg0: i32) -> (i32, i32) {
    %c0_i32 = arith.constant 0 : i32
    %c0_i32_0 = arith.constant 0 : i32
    %c0_i32_1 = arith.constant 0 : i32
    return %c0_i32, %c0_i32_0 : i32, i32
  }
  func.func @transform_2(%arg0: i32) -> (i32, i32) {
    %c0_i32 = arith.constant 0 : i32
    %c0_i32_0 = arith.constant 0 : i32
    %c0_i32_1 = arith.constant 0 : i32
    return %c0_i32, %c0_i32_0 : i32, i32
  }
  func.func @transform_3(%arg0: i32) -> (i32, i32) {
    %c0_i32 = arith.constant 0 : i32
    %c0_i32_0 = arith.constant 0 : i32
    return %arg0, %c0_i32 : i32, i32
  }
}

</mosaic_0001>

<llo_original>
// kernel: tpu_custom_call.1
$region0: #{tpu_custom_call.1}
  #allocation0 [shape = 'u32[]', space=smem, size = 0x4, offset = 0x4, fixed_abs, tag = 'smem constant byte address 0x4 - core index']
  #allocation1 [shape = 'u32[144,128]{1,0:T(1,128)}', space=vmem, size = 0x12000, scoped, tag = 'internal scratch']
  %s0 = inlined_call_operand.hbm [shape: bf16[32,128], index: 0, kind: input, shape index: {}]
  %s1 = inlined_call_operand.hbm [shape: bf16[128,128], index: 1, kind: input, shape index: {}]
  %s2 = inlined_call_operand.vmem [shape: f32[1,128], index: 2, kind: input, shape index: {}]
  %s3 = inlined_call_operand.hbm [shape: f32[32,128], index: 3, kind: output, shape index: {}]
  %s4 = sld [smem:[#allocation0]]
  $region53: #{tpu_custom_call.1} parent=0
    _
  %s6 = ssub.s32 1, %s4
  %s7 = scalar_select 0, %s6, %s4
  $region1: #{tpu_custom_call.1} parent=0
    #allocation2 [shape = 'u8[8192]{0}', space=vmem, size = 0x2000, scoped, tag = 'input window, operand 0']
    #allocation3 [shape = 's32[2]{0}', space=sflag, size = 0x8, scoped, tag = 'scoped memory for tpu_custom_call.1']
    #allocation4 [shape = 's32[2]{0}', space=sflag, size = 0x8, scoped, tag = 'scoped memory for tpu_custom_call.1']
    #allocation5 [shape = 'u8[32768]{0}', space=vmem, size = 0x8000, scoped, tag = 'input window, operand 1, single buffered']
    #allocation6 [shape = 's32[1]{0}', space=sflag, size = 0x4, scoped, tag = 'scoped memory for tpu_custom_call.1']
    #allocation7 [shape = 'u8[16384]{0}', space=vmem, size = 0x4000, scoped, tag = 'output window, operand 0']
    %8 = vsyncpa [#allocation3], 0
    %s9 = scalar_lea.sflag [#allocation3], 1
    %10 = vsyncpa %s9, 0
    %11 = vsyncpa [#allocation6], 0
    %12 = vsyncpa [#allocation4], 0
    %s13 = scalar_lea.sflag [#allocation4], 1
    %14 = vsyncpa %s13, 0
    loop: start=0, step=1, limit=4
    $region2: #{tpu_custom_call.1} parent=1 // loop_pre_header
      _
    $region3: #{tpu_custom_call.1} parent=1 // loop_header
      %s16 = sphi 0, %s20
      %p17 = scmp.ge.s32.totalorder %s16, 4
      %s26 = sphi 0, %s28
      %s29 = sphi 0, %s26
      %s30 = sphi 0, %s29
      %s46 = sphi 0, %s30
      %s50 = sphi 0, %s50
      %s52 = sphi 0, %s50
      %s53 = sphi 0, %s52
      %s67 = sphi 0, %s53
      %s71 = sphi 0, %s71
      %s73 = sphi 0, %s71
      %s74 = sphi 0, %s73
      %s88 = sphi 0, %s74
      %s94 = sphi 0, %s96
      %s97 = sphi 0, %s94
      %s98 = sphi 0, %s97
      %s114 = sphi 0, %s98
    $region4: #{tpu_custom_call.1} parent=1 // loop_header_branch
      %19 = sbr.rel (%p17) target = $region8
    $region5: #{tpu_custom_call.1} parent=1 // loop_body
      %s21 = ssub.s32 %s16, 1
      %s22 = ssub.s32 %s16, 2
      %s23 = sadd.s32 %s16, 1
      %s24 = ssub.s32 %s16, %s23
      %p25 = scmp.eq.s32.totalorder %s24, 0
      %s27 = sadd.s32 %s26, 1
      %s28 = scalar_select %p25, %s26, %s27
      %p31 = pneg %p25
      %p32 = scmp.eq.s32.totalorder %s16, 1
      %p33 = por %p31, %p32
      %p34 = scmp.ne.s32.totalorder %s26, %s29
      %p35 = scmp.eq.s32.totalorder %s16, 0
      %p36 = por %p34, %p35
      %p37 = scmp.ne.s32.totalorder %s26, %s29
      %p38 = scmp.eq.s32.totalorder %s21, 1
      %p39 = por %p37, %p38
      %p40 = scmp.ne.s32.totalorder %s29, %s30
      %p41 = scmp.eq.s32.totalorder %s21, 0
      %p42 = por %p40, %p41
      %p43 = scmp.ne.s32.totalorder %s29, %s30
      %p44 = scmp.eq.s32.totalorder %s22, 1
      %p45 = por %p43, %p44
      %p47 = scmp.ne.s32.totalorder %s30, %s46
      %p48 = scmp.eq.s32.totalorder %s22, 0
      %p49 = por %p47, %p48
      %s51 = sadd.s32 %s50, 1
      %p54 = scmp.eq.s32.totalorder %s16, 1
      %p55 = scmp.ne.s32.totalorder %s50, %s52
      %p56 = scmp.eq.s32.totalorder %s16, 0
      %p57 = por %p55, %p56
      %p58 = scmp.ne.s32.totalorder %s50, %s52
      %p59 = scmp.eq.s32.totalorder %s21, 1
      %p60 = por %p58, %p59
      %p61 = scmp.ne.s32.totalorder %s52, %s53
      %p62 = scmp.eq.s32.totalorder %s21, 0
      %p63 = por %p61, %p62
      %p64 = scmp.ne.s32.totalorder %s52, %s53
      %p65 = scmp.eq.s32.totalorder %s22, 1
      %p66 = por %p64, %p65
      %p68 = scmp.ne.s32.totalorder %s53, %s67
      %p69 = scmp.eq.s32.totalorder %s22, 0
      %p70 = por %p68, %p69
      %s72 = sadd.s32 %s71, 1
      %p75 = scmp.eq.s32.totalorder %s16, 1
      %p76 = scmp.ne.s32.totalorder %s71, %s73
      %p77 = scmp.eq.s32.totalorder %s16, 0
      %p78 = por %p76, %p77
      %p79 = scmp.ne.s32.totalorder %s71, %s73
      %p80 = scmp.eq.s32.totalorder %s21, 1
      %p81 = por %p79, %p80
      %p82 = scmp.ne.s32.totalorder %s73, %s74
      %p83 = scmp.eq.s32.totalorder %s21, 0
      %p84 = por %p82, %p83
      %p85 = scmp.ne.s32.totalorder %s73, %s74
      %p86 = scmp.eq.s32.totalorder %s22, 1
      %p87 = por %p85, %p86
      %p89 = scmp.ne.s32.totalorder %s74, %s88
      %p90 = scmp.eq.s32.totalorder %s22, 0
      %p91 = por %p89, %p90
      %s92 = ssub.s32 %s16, %s23
      %p93 = scmp.eq.s32.totalorder %s92, 0
      %s95 = sadd.s32 %s94, 1
      %s96 = scalar_select %p93, %s94, %s95
      %p99 = pneg %p93
      %p100 = scmp.eq.s32.totalorder %s16, 1
      %p101 = por %p99, %p100
      %p102 = scmp.ne.s32.totalorder %s94, %s97
      %p103 = scmp.eq.s32.totalorder %s16, 0
      %p104 = por %p102, %p103
      %p105 = scmp.ne.s32.totalorder %s94, %s97
      %p106 = scmp.eq.s32.totalorder %s21, 1
      %p107 = por %p105, %p106
      %p108 = scmp.ne.s32.totalorder %s97, %s98
      %p109 = scmp.eq.s32.totalorder %s21, 0
      %p110 = por %p108, %p109
      %p111 = scmp.ne.s32.totalorder %s97, %s98
      %p112 = scmp.eq.s32.totalorder %s22, 1
      %p113 = por %p111, %p112
      %p115 = scmp.ne.s32.totalorder %s98, %s114
      %p116 = scmp.eq.s32.totalorder %s22, 0
      %p117 = por %p115, %p116
      %p118 = scmp.le.s32.totalorder 1, %s16
      %p119 = scmp.lt.s32.totalorder %s16, 3
      %p120 = pnand %p118, %p119
      %p121 = pneg %p120
      // Predicated region
      $region9: #{tpu_custom_call.1} parent=5 // pred_check
        _
      $region10: #{tpu_custom_call.1} parent=5 // pred_check_branch
        %123 = sbr.rel (%p120) target = $region12
      $region11: #{tpu_custom_call.1} parent=5 // pred_region
        %s124 = ssub.s32 %s16, 1
        // Predicated region
        $region13: #{tpu_custom_call.1} parent=11 // pred_check
          %p125 = pneg %p63
        $region14: #{tpu_custom_call.1} parent=11 // pred_check_branch
          %127 = sbr.rel (%p125) target = $region16
        $region15: #{tpu_custom_call.1} parent=11 // pred_region
          %s129 = ssub.s32 1024, 1024
          %130 = vsyncadd [#allocation6], %s129
          %s131 = sshll.u32 [#allocation5], 4
          %s132 = int_to_ptr.vmem [resolvable:$true] %s131
          %137 = dma.hbm_to_vmem [thread:$0]  %s1, 1024, %s132, [#allocation6], 64, 64, 4
        $region16: #{tpu_custom_call.1} parent=11 // pred_fallthru
          _
        // Predicated region
        $region17: #{tpu_custom_call.1} parent=11 // pred_check
          %p138 = pneg %p84
        $region18: #{tpu_custom_call.1} parent=11 // pred_check_branch
          %140 = sbr.rel (%p138) target = $region20
        $region19: #{tpu_custom_call.1} parent=11 // pred_region
          _
        $region20: #{tpu_custom_call.1} parent=11 // pred_fallthru
          _
      $region12: #{tpu_custom_call.1} parent=5 // pred_fallthru
        _
      %p141 = scmp.lt.s32.totalorder %s16, 2
      // Predicated region
      $region21: #{tpu_custom_call.1} parent=5 // pred_check
        %p142 = pneg %p141
      $region22: #{tpu_custom_call.1} parent=5 // pred_check_branch
        %144 = sbr.rel (%p142) target = $region24
      $region23: #{tpu_custom_call.1} parent=5 // pred_region
        // Predicated region
        $region25: #{tpu_custom_call.1} parent=23 // pred_check
          %p145 = pneg %p36
        $region26: #{tpu_custom_call.1} parent=23 // pred_check_branch
          %147 = sbr.rel (%p145) target = $region28
        $region27: #{tpu_custom_call.1} parent=23 // pred_region
          %s148 = sand.u32 %s26, 1
          %s149 = scalar_lea.sflag [#allocation3], %s148
          %s150 = sand.u32 %s26, 1
          %s151 = smul.addr %s150, 8
          %s152 = scalar_lea.vmem [#allocation2], %s151
          %s153 = smul.u32 2, %s16
          %s155 = ssub.s32 128, 128
          %156 = vsyncadd %s149, %s155
          %s157 = smul.addr %s153, 64
          %s158 = scalar_lea.hbm %s0, %s157
          %s159 = sshll.u32 %s152, 4
          %s160 = int_to_ptr.vmem [resolvable:$true] %s159
          %165 = dma.hbm_to_vmem [thread:$0]  %s158, 128, %s160, %s149, 64, 64, 4
        $region28: #{tpu_custom_call.1} parent=23 // pred_fallthru
          _
      $region24: #{tpu_custom_call.1} parent=5 // pred_fallthru
        _
      %p166 = scmp.le.s32.totalorder 1, %s16
      %p167 = scmp.lt.s32.totalorder %s16, 3
      %p168 = pnand %p166, %p167
      %p169 = pneg %p168
      // Predicated region
      $region29: #{tpu_custom_call.1} parent=5 // pred_check
        _
      $region30: #{tpu_custom_call.1} parent=5 // pred_check_branch
        %171 = sbr.rel (%p168) target = $region32
      $region31: #{tpu_custom_call.1} parent=5 // pred_region
        %s172 = ssub.s32 %s16, 1
        %s173 = sand.u32 %s29, 1
        %s174 = scalar_lea.sflag [#allocation3], %s173
        %s175 = sand.u32 %s29, 1
        %s176 = smul.addr %s175, 8
        %s177 = scalar_lea.vmem [#allocation2], %s176
        // Predicated region
        $region33: #{tpu_custom_call.1} parent=31 // pred_check
          %p178 = pneg %p42
        $region34: #{tpu_custom_call.1} parent=31 // pred_check_branch
          %180 = sbr.rel (%p178) target = $region36
        $region35: #{tpu_custom_call.1} parent=31 // pred_region
          %181 = dma.done %s174, 128
        $region36: #{tpu_custom_call.1} parent=31 // pred_fallthru
          _
        // Predicated region
        $region37: #{tpu_custom_call.1} parent=31 // pred_check
          %p182 = pneg %p63
        $region38: #{tpu_custom_call.1} parent=31 // pred_check_branch
          %184 = sbr.rel (%p182) target = $region40
        $region39: #{tpu_custom_call.1} parent=31 // pred_region
          %185 = dma.done [#allocation6], 1024
        $region40: #{tpu_custom_call.1} parent=31 // pred_fallthru
          _
        %s186 = sand.u32 %s29, 1
        %s187 = scalar_lea.sflag [#allocation3], %s186
        %s188 = sand.u32 %s29, 1
        %s189 = smul.addr %s188, 8
        %s190 = scalar_lea.vmem [#allocation2], %s189
        %p191 = pneg %p42
        %p192 = pneg %p39
        %p193 = pneg %p63
        %p194 = pneg %p60
        %p195 = pneg %p84
        %p196 = pneg %p81
        %p197 = pneg %p110
        %p198 = pneg %p107
        %s199 = sand.u32 %s97, 1
        %s200 = scalar_lea.sflag [#allocation4], %s199
        %s201 = sand.u32 %s97, 1
        %s202 = smul.addr %s201, 16
        %s203 = scalar_lea.vmem [#allocation7], %s202
        %s204 = smul.u32 2, %s21
        %s205 = smul.u32 2, %s21
        %v207 = vld [vmem:[%s177] sm:$0xf]
        %v208 = vld [vmem:[%s177 + $0x4] sm:$0xf]
        %v209 = vld [vmem:[#allocation5] sm:$0xf]
        %v210 = vld [vmem:[#allocation5 + $0x4] sm:$0xf]
        %v211 = vld [vmem:[#allocation5 + $0x8] sm:$0xf]
        %v212 = vld [vmem:[#allocation5 + $0xc] sm:$0xf]
        %v213 = vld [vmem:[#allocation5 + $0x10] sm:$0xf]
        %v214 = vld [vmem:[#allocation5 + $0x14] sm:$0xf]
        %v215 = vld [vmem:[#allocation5 + $0x18] sm:$0xf]
        %v216 = vld [vmem:[#allocation5 + $0x1c] sm:$0xf]
        %v217 = vld [vmem:[#allocation5 + $0x20] sm:$0xf]
        %v218 = vld [vmem:[#allocation5 + $0x24] sm:$0xf]
        %v219 = vld [vmem:[#allocation5 + $0x28] sm:$0xf]
        %v220 = vld [vmem:[#allocation5 + $0x2c] sm:$0xf]
        %v221 = vld [vmem:[#allocation5 + $0x30] sm:$0xf]
        %v222 = vld [vmem:[#allocation5 + $0x34] sm:$0xf]
        %v223 = vld [vmem:[#allocation5 + $0x38] sm:$0xf]
        %v224 = vld [vmem:[#allocation5 + $0x3c] sm:$0xf]
        %v225 = vld [vmem:[%s2] sm:$0x1]
        %v227 = vlaneseq
        %v228 = vshrl.u32 %v227, 7
        %v229 = vsub.s32 0, %v228
        %v230 = vrot.slane %v225, %v229
        %v234 = vunpack.c.l.b16 %v207
        %v235 = vunpack.c.l.b16 %v208
        %v236 = vpack.c.b16 %v235, %v234
        %v254 = vunpack.c.l.b16 %v209
        %v255 = vunpack.c.l.b16 %v210
        %v256 = vunpack.c.l.b16 %v211
        %v257 = vunpack.c.l.b16 %v212
        %v258 = vunpack.c.l.b16 %v213
        %v259 = vunpack.c.l.b16 %v214
        %v260 = vunpack.c.l.b16 %v215
        %v261 = vunpack.c.l.b16 %v216
        %v262 = vunpack.c.l.b16 %v217
        %v263 = vunpack.c.l.b16 %v218
        %v264 = vunpack.c.l.b16 %v219
        %v265 = vunpack.c.l.b16 %v220
        %v266 = vunpack.c.l.b16 %v221
        %v267 = vunpack.c.l.b16 %v222
        %v268 = vunpack.c.l.b16 %v223
        %v269 = vunpack.c.l.b16 %v224
        %v270 = vpack.c.b16 %v255, %v254
        %v271 = vpack.c.b16 %v257, %v256
        %v272 = vpack.c.b16 %v259, %v258
        %v273 = vpack.c.b16 %v261, %v260
        %v274 = vpack.c.b16 %v263, %v262
        %v275 = vpack.c.b16 %v265, %v264
        %v276 = vpack.c.b16 %v267, %v266
        %v277 = vpack.c.b16 %v269, %v268
        %286 = vmatprep.subr.bf16.mxu0 0
        %287 = vmatpush1.bf16.msra.mxu0 %v270
        %288 = vmatprep.subr.bf16.mxu0 0
        %289 = vmatpush1.bf16.msra.mxu0 %v271
        %290 = vmatprep.subr.bf16.mxu0 0
        %291 = vmatpush1.bf16.msra.mxu0 %v272
        %292 = vmatprep.subr.bf16.mxu0 0
        %293 = vmatpush1.bf16.msra.mxu0 %v273
        %294 = vmatprep.subr.bf16.mxu0 0
        %295 = vmatpush1.bf16.msra.mxu0 %v274
        %296 = vmatprep.subr.bf16.mxu0 0
        %297 = vmatpush1.bf16.msra.mxu0 %v275
        %298 = vmatprep.subr.bf16.mxu0 0
        %299 = vmatpush1.bf16.msra.mxu0 %v276
        %300 = vmatprep.subr.bf16.mxu0 0
        %301 = vmatpush1.bf16.msra.mxu0 %v277
        %302 = vmatprep.subr.bf16.mxu0 0
        %303 = vmatpush1.bf16.msra.mxu0 0
        %304 = vmatprep.subr.bf16.mxu0 0
        %305 = vmatpush1.bf16.msra.mxu0 0
        %306 = vmatprep.subr.bf16.mxu0 0
        %307 = vmatpush1.bf16.msra.mxu0 0
        %308 = vmatprep.subr.bf16.mxu0 0
        %309 = vmatpush1.bf16.msra.mxu0 0
        %310 = vmatprep.subr.bf16.mxu0 0
        %311 = vmatpush1.bf16.msra.mxu0 0
        %312 = vmatprep.subr.bf16.mxu0 0
        %313 = vmatpush1.bf16.msra.mxu0 0
        %314 = vmatprep.subr.bf16.mxu0 0
        %315 = vmatpush1.bf16.msra.mxu0 0
        %316 = vmatprep.subr.bf16.mxu0 0
        %317 = vmatpush1.bf16.msra.mxu0 0
        %318 = vmatprep.mubr.bf16.mxu0 0
        %319 = vmatmul.mubr.bf16.gmra.mrb[0].mxu0 %v236
        %v320 = vpop.f32.mrb[0].mxu0
        %v321 = vadd.f32 %v230, %v320
        %v322 = vpop.f32.mrb[0].mxu0
        %v323 = vpop.f32.mrb[0].mxu0
        %v324 = vadd.f32 %v230, %v323
        %v325 = vpop.f32.mrb[0].mxu0
        %326 = vdwg.mxu0
        %327 = vst [vmem:[%s203] sm:$0xff] %v321
        %328 = vst [vmem:[%s203 + $0x8] sm:$0xff] %v324
        %s329 = sand.u32 %s97, 1
        %s330 = scalar_lea.sflag [#allocation4], %s329
        %s331 = sand.u32 %s97, 1
        %s332 = smul.addr %s331, 16
        %s333 = scalar_lea.vmem [#allocation7], %s332
        // Predicated region
        $region41: #{tpu_custom_call.1} parent=31 // pred_check
          %p334 = pneg %p107
        $region42: #{tpu_custom_call.1} parent=31 // pred_check_branch
          %336 = sbr.rel (%p334) target = $region44
        $region43: #{tpu_custom_call.1} parent=31 // pred_region
          %s337 = smul.u32 2, %s21
          %s339 = ssub.s32 256, 256
          %340 = vsyncadd %s330, %s339
          %s341 = smul.addr %s337, 128
          %s342 = scalar_lea.hbm %s3, %s341
          %s343 = sshll.u32 %s333, 4
          %s344 = int_to_ptr.vmem [resolvable:$true] %s343
          %349 = dma.vmem_to_hbm [thread:$0]  %s344, 256, %s342, %s330, 128, 128, 8
        $region44: #{tpu_custom_call.1} parent=31 // pred_fallthru
          _
      $region32: #{tpu_custom_call.1} parent=5 // pred_fallthru
        _
      %p350 = scmp.le.s32.totalorder 2, %s16
      // Predicated region
      $region45: #{tpu_custom_call.1} parent=5 // pred_check
        %p351 = pneg %p350
      $region46: #{tpu_custom_call.1} parent=5 // pred_check_branch
        %353 = sbr.rel (%p351) target = $region48
      $region47: #{tpu_custom_call.1} parent=5 // pred_region
        %s354 = ssub.s32 %s16, 2
        // Predicated region
        $region49: #{tpu_custom_call.1} parent=47 // pred_check
          %p355 = pneg %p113
        $region50: #{tpu_custom_call.1} parent=47 // pred_check_branch
          %357 = sbr.rel (%p355) target = $region52
        $region51: #{tpu_custom_call.1} parent=47 // pred_region
          %s358 = sand.u32 %s98, 1
          %s359 = scalar_lea.sflag [#allocation4], %s358
          %s360 = sand.u32 %s98, 1
          %s361 = smul.addr %s360, 16
          %s362 = scalar_lea.vmem [#allocation7], %s361
          %363 = dma.done %s359, 256
        $region52: #{tpu_custom_call.1} parent=47 // pred_fallthru
          _
      $region48: #{tpu_custom_call.1} parent=5 // pred_fallthru
        _
    $region6: #{tpu_custom_call.1} parent=1 // loop_footer
      %s20 = sadd.s32 1, %s16
    $region7: #{tpu_custom_call.1} parent=1 // loop_footer_branch
      %15 = sbr.rel target = $region3
    $region8: #{tpu_custom_call.1} parent=1 // loop_exit
      _
    %364 = vsyncpa [#allocation3], 1
    %s365 = scalar_lea.sflag [#allocation3], 1
    %366 = vsyncpa %s365, 1
    %367 = vsyncpa [#allocation6], 1
    %368 = vsyncpa [#allocation4], 1
    %s369 = scalar_lea.sflag [#allocation4], 1
    %370 = vsyncpa %s369, 1

</llo_original>
